<compile_context>
chip_gen: v7x
topology: tpu7x:2x2x1
jax: 0.10.0
libtpu: 0.0.40
codegen_flags: <defaults>
</compile_context>

<pallas_src>
import functools

import jax
import jax.numpy as jnp
from jax.experimental import pallas as pl
from jax.experimental.pallas import tpu as pltpu

ALPHA = 0.4
GAMMA = 0.5
LANES = 128


def _tpu_tuning():
    """Per-generation (max_block_rows, num_core_splits)."""
    max_block_rows, splits = 2048, 1          # conservative default (v2/v3/unknown)
    try:
        kind = jax.devices()[0].device_kind.lower()
    except Exception:  # pragma: no cover - defensive
        return max_block_rows, splits
    if "v5" in kind and ("lite" in kind or "v5e" in kind):
        return 2048, 1        # v5e: 1 TC, 16 MiB scoped-VMEM default
    if "v6" in kind:
        return 4096, 1        # v6e: 1 TC, 32 MiB scoped-VMEM default
    if "v7" in kind or "tpu7" in kind:
        return 4096, 2        # v7x: 2 TCs/chip, ~3.2 TB/s HBM per TC
    if "v4" in kind or "v5" in kind:
        return 4096, 2        # v4 / v5p: megacore (2 TCs)
    return max_block_rows, splits


def _ftl_kernel(x_ref, t_ref, out_ref, acc_tp_ref, acc_s_ref, acc_t_ref, *,
                rows_valid, block_rows, acc_rows, blocks_per_split, needs_mask):
    """Accumulates sum(t*sigmoid(x)), sum(sigmoid(x)), sum(t) per core-split."""
    i = pl.program_id(1)

    @pl.when(i == 0)
    def _init():
        acc_tp_ref[...] = jnp.zeros_like(acc_tp_ref)
        acc_s_ref[...] = jnp.zeros_like(acc_s_ref)
        acc_t_ref[...] = jnp.zeros_like(acc_t_ref)

    x = x_ref[...].astype(jnp.float32)
    t = t_ref[...].astype(jnp.float32)
    # TODO(synk): if EUP (sigmoid) ever binds on v6e/v7x with bf16 inputs,
    # compute sigmoid in bf16 there (not on v5e, which has no bf16 EUP).
    s = jax.nn.sigmoid(x)

    groups = block_rows // acc_rows

    def _accumulate(s_v, t_v):
        # Per-step partial reduction into one-vreg (acc_rows, 128) accumulators.
        # The (block_rows,128)->(groups,acc_rows,128) regrouping does not cross
        # the (8,128) tile boundary (free); the axis-0 sum is pure vreg adds.
        def _fold(v):
            if groups > 1:
                v = v.reshape(groups, acc_rows, LANES).sum(axis=0)
            return v
        acc_tp_ref[...] += _fold(t_v * s_v)
        acc_s_ref[...] += _fold(s_v)
        acc_t_ref[...] += _fold(t_v)

    if not needs_mask:
        _accumulate(s, t)
    else:
        # Only edge / clamped-dummy tiles pay for masking; interior tiles take
        # the unmasked fast path so the kernel stays HBM-bound, not VALU-bound.
        b = pl.program_id(0) * blocks_per_split + i     # logical (unclamped) id
        start_row = b * block_rows
        is_interior = start_row + block_rows <= rows_valid

        @pl.when(is_interior)
        def _fast():
            _accumulate(s, t)

        @pl.when(jnp.logical_not(is_interior))
        def _edge():
            # Row-only validity mask (no lane iota, no *LANES multiply).  Both
            # s and t are zeroed so garbage/out-of-range rows contribute 0.
            row = jax.lax.broadcasted_iota(jnp.int32, s.shape, 0)
            valid = (start_row + row) < rows_valid
            _accumulate(jnp.where(valid, s, 0.0), jnp.where(valid, t, 0.0))

    @pl.when(i == pl.num_programs(1) - 1)
    def _finalize():
        out_ref[0, 0] = jnp.sum(acc_tp_ref[...])
        out_ref[0, 1] = jnp.sum(acc_s_ref[...])
        out_ref[0, 2] = jnp.sum(acc_t_ref[...])


def _reduce_sums(x_flat, t_flat):
    """Returns (true_pos, false_neg, false_pos) global sums."""
    n = x_flat.shape[0]
    rows = n // LANES
    n_aligned = rows * LANES
    rem = n - n_aligned

    # <=127-element tail folded in with plain jnp (negligible work); no
    # full-array concatenate/pad pass for misaligned sizes.
    tail_tp = tail_s = tail_t = jnp.float32(0.0)
    if rem:
        xt = x_flat[n_aligned:].astype(jnp.float32)
        tt = t_flat[n_aligned:].astype(jnp.float32)
        st = jax.nn.sigmoid(xt)
        tail_tp = jnp.sum(tt * st)
        tail_s = jnp.sum(st)
        tail_t = jnp.sum(tt)

    if rows == 0:
        tp, sum_s, sum_t = tail_tp, tail_s, tail_t
    else:
        if rem:
            # TODO(synk): the aligned-prefix slice still costs one copy for
            # non-multiple-of-128 sizes; aligned sizes (the common case) are
            # copy-free.
            x_flat = x_flat[:n_aligned]
            t_flat = t_flat[:n_aligned]
        x2 = x_flat.reshape(rows, LANES)
        t2 = t_flat.reshape(rows, LANES)

        max_block_rows, splits_pref = _tpu_tuning()
        block_rows = rows if rows <= max_block_rows else max_block_rows
        acc_rows = 8 if block_rows % 8 == 0 else block_rows
        total_blocks = pl.cdiv(rows, block_rows)
        splits = splits_pref if total_blocks >= splits_pref else 1
        bps = pl.cdiv(total_blocks, splits)              # tiles per core-split
        needs_mask = splits * bps * block_rows != rows   # edge / dummy tiles?

        def in_index(c, i):
            # Clamp dummy trailing tiles onto a valid one; the in-kernel row
            # mask zeroes their contribution.
            return (jnp.minimum(c * bps + i, total_blocks - 1), 0)

        kernel = functools.partial(
            _ftl_kernel,
            rows_valid=rows,
            block_rows=block_rows,
            acc_rows=acc_rows,
            blocks_per_split=bps,
            needs_mask=needs_mask)

        sums = pl.pallas_call(
            kernel,
            out_shape=jax.ShapeDtypeStruct((splits, 3), jnp.float32),
            grid_spec=pltpu.PrefetchScalarGridSpec(
                num_scalar_prefetch=0,
                grid=(splits, bps),
                in_specs=[
                    pl.BlockSpec((block_rows, LANES), in_index),
                    pl.BlockSpec((block_rows, LANES), in_index),
                ],
                out_specs=pl.BlockSpec((1, 3), lambda c, i: (c, 0),
                                       memory_space=pltpu.SMEM),
                scratch_shapes=[pltpu.VMEM((acc_rows, LANES), jnp.float32)] * 3,
            ),
            # On 2-TC chips the leading "parallel" axis should shard across
            # TensorCores; if profiling shows one core idle on v7x, switch this
            # axis to pltpu.CORE_PARALLEL (keep per-split rows + wrapper sum).
            compiler_params=pltpu.CompilerParams(
                dimension_semantics=("parallel", "arbitrary")),
        )(x2, t2)

        tp = jnp.sum(sums[:, 0]) + tail_tp
        sum_s = jnp.sum(sums[:, 1]) + tail_s
        sum_t = jnp.sum(sums[:, 2]) + tail_t

    # Clamp derived sums: f32 rounding can make them slightly negative, which
    # would push pt_1 > 1 and make (1 - pt_1)**0.5 NaN.
    false_neg = jnp.maximum(sum_t - tp, 0.0)     # sum(t * (1 - s))
    false_pos = jnp.maximum(sum_s - tp, 0.0)     # sum((1 - t) * s)
    return tp, false_neg, false_pos


@functools.partial(jax.jit, static_argnames=("alpha", "gamma"))
def focal_tversky_loss(inp, target, alpha=ALPHA, gamma=GAMMA):
    smooth = 1.0
    true_pos, false_neg, false_pos = _reduce_sums(
        inp.reshape(-1), target.reshape(-1))
    pt_1 = (true_pos + smooth) / (
        true_pos + alpha * false_neg + (1.0 - alpha) * false_pos + smooth)
    return jnp.power(jnp.maximum(1.0 - pt_1, 0.0), gamma)


def _reference(inp, target, alpha=ALPHA, gamma=GAMMA):
    smooth = 1.0
    s = jax.nn.sigmoid(inp.astype(jnp.float32)).reshape(-1)
    t = target.astype(jnp.float32).reshape(-1)
    tp = jnp.sum(t * s)
    fn = jnp.sum(t * (1.0 - s))
    fp = jnp.sum((1.0 - t) * s)
    pt_1 = (tp + smooth) / (tp + alpha * fn + (1.0 - alpha) * fp + smooth)
    return jnp.power(1.0 - pt_1, gamma)


if __name__ == "__main__":
    key = jax.random.PRNGKey(0)
    k1, k2 = jax.random.split(key)

    # NCHW-style logits + binary target, same shapes the PyTorch module expects.
    x = jax.random.normal(k1, (2, 4, 16, 16), dtype=jnp.float32)
    tgt = (jax.random.uniform(k2, (2, 4, 16, 16)) > 0.5).astype(jnp.float32)

    loss = focal_tversky_loss(x, tgt)
    jax.block_until_ready(loss)
    ref = _reference(x, tgt)
    assert jnp.allclose(loss, ref, atol=1e-5, rtol=1e-5), (loss, ref)

    # Non-multiple-of-128 size: exercises the aligned-prefix + jnp-tail path
    # and the small-tile (acc_rows != 8) accumulator path.
    k3, k4 = jax.random.split(k1)
    x2 = jax.random.normal(k3, (2, 3, 9, 9), dtype=jnp.float32)
    t2 = (jax.random.uniform(k4, (2, 3, 9, 9)) > 0.5).astype(jnp.float32)
    loss2 = focal_tversky_loss(x2, t2)
    jax.block_until_ready(loss2)
    ref2 = _reference(x2, t2)
    assert jnp.allclose(loss2, ref2, atol=1e-5, rtol=1e-5), (loss2, ref2)

    print("KERNEL_OK")
</pallas_src>

<mosaic_0001>
module attributes {stable_mosaic.version = 11 : i64} {
  func.func @_ftl_kernel(%arg0: i32, %arg1: i32, %arg2: memref<16x128xf32, #tpu.memory_space<vmem>>, %arg3: memref<16x128xf32, #tpu.memory_space<vmem>>, %arg4: memref<1x3xf32, #tpu.memory_space<smem>>, %arg5: memref<8x128xf32, #tpu.memory_space<vmem>>, %arg6: memref<8x128xf32, #tpu.memory_space<vmem>>, %arg7: memref<8x128xf32, #tpu.memory_space<vmem>>) attributes {dimension_semantics = [#tpu.dimension_semantics<parallel>, #tpu.dimension_semantics<arbitrary>], iteration_bounds = array<i64: 1, 1>, scalar_prefetch = 0 : i64, scratch_operands = 3 : i64, tpu.core_type = #tpu.core_type<tc>, window_params = [{transform_indices = @transform_0, window_bounds = array<i64: 16, 128>}, {transform_indices = @transform_1, window_bounds = array<i64: 16, 128>}, {transform_indices = @transform_2, window_bounds = array<i64: 1, 3>}]} {
    %c0_i32 = arith.constant 0 : i32
    %0 = arith.cmpi eq, %arg1, %c0_i32 : i32
    %1 = arith.extui %0 : i1 to i32
    %c0_i32_0 = arith.constant 0 : i32
    %2 = arith.cmpi ne, %1, %c0_i32_0 : i32
    scf.if %2 {
      %cst_21 = arith.constant 0.000000e+00 : f32
      %29 = vector.broadcast %cst_21 : f32 to vector<8x128xf32>
      %c0_22 = arith.constant 0 : index
      %c0_23 = arith.constant 0 : index
      %30 = vector.load %arg5[%c0_22, %c0_23] : memref<8x128xf32, #tpu.memory_space<vmem>>, vector<8x128xf32>
      tpu.vector_store %arg5[%c0_22, %c0_23], %29 {strides = array<i32>} : memref<8x128xf32, #tpu.memory_space<vmem>>, vector<8x128xf32>,
      %cst_24 = arith.constant 0.000000e+00 : f32
      %31 = vector.broadcast %cst_24 : f32 to vector<8x128xf32>
      %c0_25 = arith.constant 0 : index
      %c0_26 = arith.constant 0 : index
      %32 = vector.load %arg6[%c0_25, %c0_26] : memref<8x128xf32, #tpu.memory_space<vmem>>, vector<8x128xf32>
      tpu.vector_store %arg6[%c0_25, %c0_26], %31 {strides = array<i32>} : memref<8x128xf32, #tpu.memory_space<vmem>>, vector<8x128xf32>,
      %cst_27 = arith.constant 0.000000e+00 : f32
      %33 = vector.broadcast %cst_27 : f32 to vector<8x128xf32>
      %c0_28 = arith.constant 0 : index
      %c0_29 = arith.constant 0 : index
      %34 = vector.load %arg7[%c0_28, %c0_29] : memref<8x128xf32, #tpu.memory_space<vmem>>, vector<8x128xf32>
      tpu.vector_store %arg7[%c0_28, %c0_29], %33 {strides = array<i32>} : memref<8x128xf32, #tpu.memory_space<vmem>>, vector<8x128xf32>,
    } else {
    }
    %c0 = arith.constant 0 : index
    %c0_1 = arith.constant 0 : index
    %3 = vector.load %arg2[%c0, %c0_1] : memref<16x128xf32, #tpu.memory_space<vmem>>, vector<16x128xf32>
    %c0_2 = arith.constant 0 : index
    %c0_3 = arith.constant 0 : index
    %4 = vector.load %arg3[%c0_2, %c0_3] : memref<16x128xf32, #tpu.memory_space<vmem>>, vector<16x128xf32>
    %5 = arith.negf %3 : vector<16x128xf32>
    %6 = math.exp %5 : vector<16x128xf32>
    %cst = arith.constant 1.000000e+00 : f32
    %7 = vector.broadcast %cst : f32 to vector<16x128xf32>
    %8 = arith.addf %7, %6 : vector<16x128xf32>
    %9 = arith.divf %7, %8 : vector<16x128xf32>
    %c0_4 = arith.constant 0 : index
    %c0_5 = arith.constant 0 : index
    %10 = vector.load %arg5[%c0_4, %c0_5] : memref<8x128xf32, #tpu.memory_space<vmem>>, vector<8x128xf32>
    %11 = arith.mulf %4, %9 : vector<16x128xf32>
    %12 = vector.shape_cast %11 : vector<16x128xf32> to vector<2x8x128xf32>
    %cst_6 = arith.constant dense<0.000000e+00> : vector<8x128xf32>
    %13 = vector.multi_reduction <add>, %12, %cst_6 [0] : vector<2x8x128xf32> to vector<8x128xf32>
    %14 = arith.addf %10, %13 : vector<8x128xf32>
    %c0_7 = arith.constant 0 : index
    %c0_8 = arith.constant 0 : index
    %15 = vector.load %arg5[%c0_7, %c0_8] : memref<8x128xf32, #tpu.memory_space<vmem>>, vector<8x128xf32>
    tpu.vector_store %arg5[%c0_7, %c0_8], %14 {strides = array<i32>} : memref<8x128xf32, #tpu.memory_space<vmem>>, vector<8x128xf32>,
    %c0_9 = arith.constant 0 : index
    %c0_10 = arith.constant 0 : index
    %16 = vector.load %arg6[%c0_9, %c0_10] : memref<8x128xf32, #tpu.memory_space<vmem>>, vector<8x128xf32>
    %17 = vector.shape_cast %9 : vector<16x128xf32> to vector<2x8x128xf32>
    %cst_11 = arith.constant dense<0.000000e+00> : vector<8x128xf32>
    %18 = vector.multi_reduction <add>, %17, %cst_11 [0] : vector<2x8x128xf32> to vector<8x128xf32>
    %19 = arith.addf %16, %18 : vector<8x128xf32>
    %c0_12 = arith.constant 0 : index
    %c0_13 = arith.constant 0 : index
    %20 = vector.load %arg6[%c0_12, %c0_13] : memref<8x128xf32, #tpu.memory_space<vmem>>, vector<8x128xf32>
    tpu.vector_store %arg6[%c0_12, %c0_13], %19 {strides = array<i32>} : memref<8x128xf32, #tpu.memory_space<vmem>>, vector<8x128xf32>,
    %c0_14 = arith.constant 0 : index
    %c0_15 = arith.constant 0 : index
    %21 = vector.load %arg7[%c0_14, %c0_15] : memref<8x128xf32, #tpu.memory_space<vmem>>, vector<8x128xf32>
    %22 = vector.shape_cast %4 : vector<16x128xf32> to vector<2x8x128xf32>
    %cst_16 = arith.constant dense<0.000000e+00> : vector<8x128xf32>
    %23 = vector.multi_reduction <add>, %22, %cst_16 [0] : vector<2x8x128xf32> to vector<8x128xf32>
    %24 = arith.addf %21, %23 : vector<8x128xf32>
    %c0_17 = arith.constant 0 : index
    %c0_18 = arith.constant 0 : index
    %25 = vector.load %arg7[%c0_17, %c0_18] : memref<8x128xf32, #tpu.memory_space<vmem>>, vector<8x128xf32>
    tpu.vector_store %arg7[%c0_17, %c0_18], %24 {strides = array<i32>} : memref<8x128xf32, #tpu.memory_space<vmem>>, vector<8x128xf32>,
    %c0_i32_19 = arith.constant 0 : i32
    %26 = arith.cmpi eq, %arg1, %c0_i32_19 : i32
    %27 = arith.extui %26 : i1 to i32
    %c0_i32_20 = arith.constant 0 : i32
    %28 = arith.cmpi ne, %27, %c0_i32_20 : i32
    scf.if %28 {
      %c0_21 = arith.constant 0 : index
      %c0_22 = arith.constant 0 : index
      %29 = vector.load %arg5[%c0_21, %c0_22] : memref<8x128xf32, #tpu.memory_space<vmem>>, vector<8x128xf32>
      %30 = vector.shape_cast %29 : vector<8x128xf32> to vector<1x8x128xf32>
      %cst_23 = arith.constant dense<0.000000e+00> : vector<1xf32>
      %31 = vector.multi_reduction <add>, %30, %cst_23 [1, 2] : vector<1x8x128xf32> to vector<1xf32>
      %32 = vector.shape_cast %31 : vector<1xf32> to vector<1x1x1xf32>
      %33 = vector.extract %32[0, 0, 0] : f32 from vector<1x1x1xf32>
      %c0_24 = arith.constant 0 : index
      %c0_25 = arith.constant 0 : index
      %34 = memref.load %arg4[%c0_24, %c0_25] : memref<1x3xf32, #tpu.memory_space<smem>>
      memref.store %33, %arg4[%c0_24, %c0_25] : memref<1x3xf32, #tpu.memory_space<smem>>
      %c0_26 = arith.constant 0 : index
      %c0_27 = arith.constant 0 : index
      %35 = vector.load %arg6[%c0_26, %c0_27] : memref<8x128xf32, #tpu.memory_space<vmem>>, vector<8x128xf32>
      %36 = vector.shape_cast %35 : vector<8x128xf32> to vector<1x8x128xf32>
      %cst_28 = arith.constant dense<0.000000e+00> : vector<1xf32>
      %37 = vector.multi_reduction <add>, %36, %cst_28 [1, 2] : vector<1x8x128xf32> to vector<1xf32>
      %38 = vector.shape_cast %37 : vector<1xf32> to vector<1x1x1xf32>
      %39 = vector.extract %38[0, 0, 0] : f32 from vector<1x1x1xf32>
      %c0_29 = arith.constant 0 : index
      %c1 = arith.constant 1 : index
      %40 = memref.load %arg4[%c0_29, %c1] : memref<1x3xf32, #tpu.memory_space<smem>>
      memref.store %39, %arg4[%c0_29, %c1] : memref<1x3xf32, #tpu.memory_space<smem>>
      %c0_30 = arith.constant 0 : index
      %c0_31 = arith.constant 0 : index
      %41 = vector.load %arg7[%c0_30, %c0_31] : memref<8x128xf32, #tpu.memory_space<vmem>>, vector<8x128xf32>
      %42 = vector.shape_cast %41 : vector<8x128xf32> to vector<1x8x128xf32>
      %cst_32 = arith.constant dense<0.000000e+00> : vector<1xf32>
      %43 = vector.multi_reduction <add>, %42, %cst_32 [1, 2] : vector<1x8x128xf32> to vector<1xf32>
      %44 = vector.shape_cast %43 : vector<1xf32> to vector<1x1x1xf32>
      %45 = vector.extract %44[0, 0, 0] : f32 from vector<1x1x1xf32>
      %c0_33 = arith.constant 0 : index
      %c2 = arith.constant 2 : index
      %46 = memref.load %arg4[%c0_33, %c2] : memref<1x3xf32, #tpu.memory_space<smem>>
      memref.store %45, %arg4[%c0_33, %c2] : memref<1x3xf32, #tpu.memory_space<smem>>
    } else {
    }
    return
  }
  func.func @transform_0(%arg0: i32, %arg1: i32) -> (i32, i32) {
    %c1_i32 = arith.constant 1 : i32
    %0 = arith.muli %arg0, %c1_i32 : i32
    %1 = arith.addi %0, %arg1 : i32
    %c0_i32 = arith.constant 0 : i32
    %2 = arith.minsi %1, %c0_i32 : i32
    %c0_i32_0 = arith.constant 0 : i32
    %c0_i32_1 = arith.constant 0 : i32
    return %2, %c0_i32_0 : i32, i32
  }
  func.func @transform_1(%arg0: i32, %arg1: i32) -> (i32, i32) {
    %c1_i32 = arith.constant 1 : i32
    %0 = arith.muli %arg0, %c1_i32 : i32
    %1 = arith.addi %0, %arg1 : i32
    %c0_i32 = arith.constant 0 : i32
    %2 = arith.minsi %1, %c0_i32 : i32
    %c0_i32_0 = arith.constant 0 : i32
    %c0_i32_1 = arith.constant 0 : i32
    return %2, %c0_i32_0 : i32, i32
  }
  func.func @transform_2(%arg0: i32, %arg1: i32) -> (i32, i32) {
    %c0_i32 = arith.constant 0 : i32
    %c0_i32_0 = arith.constant 0 : i32
    return %arg0, %c0_i32 : i32, i32
  }
}

</mosaic_0001>

<llo_original>
// kernel: focal_tversky_loss.1
$region0: #{focal_tversky_loss.1}
  #allocation0 [shape = 'u32[]', space=smem, size = 0x4, offset = 0x4, fixed_abs, tag = 'smem constant byte address 0x4 - core index']
  #allocation1 [shape = 'u32[144,128]{1,0:T(1,128)}', space=vmem, size = 0x12000, scoped, tag = 'internal scratch']
  #allocation2 [shape = 'f32[8,128]{1,0:T(8,128)}', space=vmem, size = 0x1000, scoped, tag = 'scratch operand']
  #allocation3 [shape = 'f32[8,128]{1,0:T(8,128)}', space=vmem, size = 0x1000, scoped, tag = 'scratch operand']
  #allocation4 [shape = 'f32[8,128]{1,0:T(8,128)}', space=vmem, size = 0x1000, scoped, tag = 'scratch operand']
  %s0 = inlined_call_operand.vmem [shape: f32[16,128], index: 0, kind: input, shape index: {}]
  %s1 = inlined_call_operand.vmem [shape: f32[16,128], index: 1, kind: input, shape index: {}]
  %s2 = inlined_call_operand.vmem [shape: f32[1,3], index: 2, kind: output, shape index: {}]
  %s3 = sld [smem:[#allocation0]]
  $region26: #{focal_tversky_loss.1} parent=0
    _
  %s5 = ssub.s32 1, %s3
  %s6 = scalar_select 0, %s5, %s3
  $region1: #{focal_tversky_loss.1} parent=0
    #allocation5 [shape = 'u8[512]{0}', space=smem, size = 0x200, scoped, tag = 'output window, operand 0, single buffered']
    #allocation6 [shape = 's32[1]{0}', space=sflag, size = 0x4, scoped, tag = 'scoped memory for focal_tversky_loss.1']
    %7 = vsyncpa [#allocation6], 0
    // Predicated region
    $region2: #{focal_tversky_loss.1} parent=1 // pred_check
      _
    $region3: #{focal_tversky_loss.1} parent=1 // pred_check_branch
      %9 = sbr.rel (0) target = $region5
    $region4: #{focal_tversky_loss.1} parent=1 // pred_region
      %s10 = sadd.s32 0, 0
      %p11 = scmp.lt.s32.totalorder %s10, 0
      %s12 = scalar_select %p11, %s10, 0
      %s13 = smul.u32 2, %s12
      %p14 = scmp.lt.s32.totalorder %s13, 1
      %s15 = scalar_select %p14, %s13, 1
      %s16 = smul.addr %s15, 8
      %s17 = scalar_lea.vmem %s0, %s16
      %s18 = sadd.s32 0, 0
      %p19 = scmp.lt.s32.totalorder %s18, 0
      %s20 = scalar_select %p19, %s18, 0
      %s21 = smul.u32 2, %s20
    $region5: #{focal_tversky_loss.1} parent=1 // pred_fallthru
      _
    // Predicated region
    $region6: #{focal_tversky_loss.1} parent=1 // pred_check
      _
    $region7: #{focal_tversky_loss.1} parent=1 // pred_check_branch
      %23 = sbr.rel (0) target = $region9
    $region8: #{focal_tversky_loss.1} parent=1 // pred_region
      %s24 = sadd.s32 0, 0
      %p25 = scmp.lt.s32.totalorder %s24, 0
      %s26 = scalar_select %p25, %s24, 0
      %s27 = smul.u32 2, %s26
      %p28 = scmp.lt.s32.totalorder %s27, 1
      %s29 = scalar_select %p28, %s27, 1
      %s30 = smul.addr %s29, 8
      %s31 = scalar_lea.vmem %s1, %s30
      %s32 = sadd.s32 0, 0
      %p33 = scmp.lt.s32.totalorder %s32, 0
      %s34 = scalar_select %p33, %s32, 0
      %s35 = smul.u32 2, %s34
    $region9: #{focal_tversky_loss.1} parent=1 // pred_fallthru
      _
    %s36 = sadd.s32 0, 0
    %p37 = scmp.lt.s32.totalorder %s36, 0
    %s38 = scalar_select %p37, %s36, 0
    %s39 = smul.u32 2, %s38
    %p40 = scmp.lt.s32.totalorder %s39, 1
    %s41 = scalar_select %p40, %s39, 1
    %s42 = smul.addr %s41, 8
    %s43 = scalar_lea.vmem %s0, %s42
    %s44 = sadd.s32 0, 0
    %p45 = scmp.lt.s32.totalorder %s44, 0
    %s46 = scalar_select %p45, %s44, 0
    %s47 = smul.u32 2, %s46
    %p48 = scmp.lt.s32.totalorder %s47, 1
    %s49 = scalar_select %p48, %s47, 1
    %s50 = smul.addr %s49, 8
    %s51 = scalar_lea.vmem %s1, %s50
    %s52 = sadd.s32 0, 0
    %p53 = scmp.lt.s32.totalorder %s52, 0
    %s54 = scalar_select %p53, %s52, 0
    %s55 = smul.u32 2, %s54
    %p56 = scmp.lt.s32.totalorder %s55, 1
    %s57 = scalar_select %p56, %s55, 1
    %s58 = smul.addr %s57, 8
    %s59 = scalar_lea.vmem %s0, %s58
    %s60 = sadd.s32 0, 0
    %p61 = scmp.lt.s32.totalorder %s60, 0
    %s62 = scalar_select %p61, %s60, 0
    %s63 = smul.u32 2, %s62
    %s64 = sadd.s32 0, 0
    %p65 = scmp.lt.s32.totalorder %s64, 0
    %s66 = scalar_select %p65, %s64, 0
    %s67 = smul.u32 2, %s66
    %p68 = scmp.lt.s32.totalorder %s67, 1
    %s69 = scalar_select %p68, %s67, 1
    %s70 = smul.addr %s69, 8
    %s71 = scalar_lea.vmem %s1, %s70
    %s72 = sadd.s32 0, 0
    %p73 = scmp.lt.s32.totalorder %s72, 0
    %s74 = scalar_select %p73, %s72, 0
    %s75 = smul.u32 2, %s74
    %p76 = scmp.eq.s32.totalorder 0, 0
    // Predicated region
    $region10: #{focal_tversky_loss.1} parent=1 // pred_check
      %p77 = pneg %p76
    $region11: #{focal_tversky_loss.1} parent=1 // pred_check_branch
      %79 = sbr.rel (%p77) target = $region13
    $region12: #{focal_tversky_loss.1} parent=1 // pred_region
      %80 = vst [vmem:[#allocation2] sm:$0xff] 0.0
      %81 = vst [vmem:[#allocation3] sm:$0xff] 0.0
      %82 = vst [vmem:[#allocation4] sm:$0xff] 0.0
    $region13: #{focal_tversky_loss.1} parent=1 // pred_fallthru
      _
    %v83 = vld [vmem:[%s59] sm:$0xff]
    %v84 = vld [vmem:[%s59 + $0x8] sm:$0xff]
    %v85 = vld [vmem:[%s71] sm:$0xff]
    %v86 = vld [vmem:[%s71 + $0x8] sm:$0xff]
    %v87 = vxor.u32 %v83, 2147483648
    %v88 = vxor.u32 %v84, 2147483648
    %v89 = vmul.f32 %v87, 1.442695
    %v90 = vpow.pop %v89
    %v91 = vmul.f32 %v88, 1.442695
    %v92 = vpow.pop %v91
    %v93 = vadd.f32 %v90, 1.0
    %v94 = vadd.f32 %v92, 1.0
    %v95 = vrcp.pop %v93
    %v96 = vmul.f32 1.0, %v95
    %v97 = vrcp.pop %v94
    %v98 = vmul.f32 1.0, %v97
    %v99 = vld [vmem:[#allocation2] sm:$0xff]
    %v100 = vmul.f32 %v85, %v96
    %v101 = vmul.f32 %v86, %v98
    %v102 = vadd.f32 %v100, %v101
    %v103 = vadd.f32 %v99, %v102
    %104 = vst [vmem:[#allocation2] sm:$0xff] %v103
    %v105 = vld [vmem:[#allocation3] sm:$0xff]
    %v106 = vadd.f32 %v96, %v98
    %v107 = vadd.f32 %v105, %v106
    %108 = vst [vmem:[#allocation3] sm:$0xff] %v107
    %v109 = vld [vmem:[#allocation4] sm:$0xff]
    %v110 = vadd.f32 %v85, %v86
    %v111 = vadd.f32 %v109, %v110
    %112 = vst [vmem:[#allocation4] sm:$0xff] %v111
    // Predicated region
    $region14: #{focal_tversky_loss.1} parent=1 // pred_check
      %p113 = pneg %p76
    $region15: #{focal_tversky_loss.1} parent=1 // pred_check_branch
      %115 = sbr.rel (%p113) target = $region17
    $region16: #{focal_tversky_loss.1} parent=1 // pred_region
      %v116 = vld [vmem:[#allocation2] sm:$0xff]
      %117 = vadd.xlane.f32.xlu0 %v116
      %v118 = vpop.xlane.xlu0 %117
      %v119 = vrot.slane %v118, 4
      %v120 = vadd.f32 %v118, %v119
      %v121 = vrot.slane %v120, 2
      %v122 = vadd.f32 %v120, %v121
      %v123 = vrot.slane %v122, 1
      %v124 = vadd.f32 %v122, %v123
      %s125 = vtos %v124
      %s126 = scalar_lea.smem [#allocation5], 0
      %127 = sst [smem:[%s126]] %s125
      %v128 = vld [vmem:[#allocation3] sm:$0xff]
      %129 = vadd.xlane.f32.xlu0 %v128
      %v130 = vpop.xlane.xlu0 %129
      %v131 = vrot.slane %v130, 4
      %v132 = vadd.f32 %v130, %v131
      %v133 = vrot.slane %v132, 2
      %v134 = vadd.f32 %v132, %v133
      %v135 = vrot.slane %v134, 1
      %v136 = vadd.f32 %v134, %v135
      %s137 = vtos %v136
      %s138 = scalar_lea.smem [#allocation5], 1
      %139 = sst [smem:[%s138]] %s137
      %v140 = vld [vmem:[#allocation4] sm:$0xff]
      %141 = vadd.xlane.f32.xlu0 %v140
      %v142 = vpop.xlane.xlu0 %141
      %v143 = vrot.slane %v142, 4
      %v144 = vadd.f32 %v142, %v143
      %v145 = vrot.slane %v144, 2
      %v146 = vadd.f32 %v144, %v145
      %v147 = vrot.slane %v146, 1
      %v148 = vadd.f32 %v146, %v147
      %s149 = vtos %v148
      %s150 = scalar_lea.smem [#allocation5], 2
      %151 = sst [smem:[%s150]] %s149
    $region17: #{focal_tversky_loss.1} parent=1 // pred_fallthru
      _
    // Predicated region
    $region18: #{focal_tversky_loss.1} parent=1 // pred_check
      _
    $region19: #{focal_tversky_loss.1} parent=1 // pred_check_branch
      %153 = sbr.rel (0) target = $region21
    $region20: #{focal_tversky_loss.1} parent=1 // pred_region
      %s155 = ssub.s32 16, 16
      %156 = vsyncadd [#allocation6], %s155
      %s158 = sshll.u32 %s2, 4
      %s159 = int_to_ptr.vmem [resolvable:$true] %s158
      %161 = dma.smem_to_vmem [#allocation5], 16, %s159, [#allocation6]
    $region21: #{focal_tversky_loss.1} parent=1 // pred_fallthru
      _
    // Predicated region
    $region22: #{focal_tversky_loss.1} parent=1 // pred_check
      _
    $region23: #{focal_tversky_loss.1} parent=1 // pred_check_branch
      %163 = sbr.rel (0) target = $region25
    $region24: #{focal_tversky_loss.1} parent=1 // pred_region
      %164 = dma.done [#allocation6], 16
    $region25: #{focal_tversky_loss.1} parent=1 // pred_fallthru
      _
    %165 = sfence
    %166 = vsyncpa [#allocation6], 1

</llo_original>
